<compile_context>
chip_gen: v6e
topology: v6e:2x2x1
jax: 0.10.0
libtpu: 0.0.40
codegen_flags: <defaults>
</compile_context>

<pallas_src>
import functools
import math

import jax
import jax.numpy as jnp
from jax.experimental import pallas as pl
from jax.experimental.pallas import tpu as pltpu


_VMEM_BUDGET_BYTES = 8 * 1024 * 1024  # double-buffered output tile budget (v5e-safe)


def _choose_row_tile(total_rows: int, row_bytes: int,
                     vmem_budget_bytes: int = _VMEM_BUDGET_BYTES) -> int:
    """Sublane tile: full extent, or a multiple of 8 rows that fits VMEM (x2 buf)."""
    max_rows = max(8, vmem_budget_bytes // (2 * row_bytes))  # 2x: double buffer
    if total_rows <= max_rows:
        # Whole extent fits in one tile. If it is large and splits cleanly,
        # keep >= 2 grid steps so v7x's two TensorCores can both write.
        if total_rows >= 512 and total_rows % 16 == 0 and (total_rows // 2) <= max_rows:
            return total_rows // 2
        return total_rows  # block equal to the full array dim is always legal
    tile = (max_rows // 8) * 8
    return min(tile, 1024)  # pipelining gains saturate around 512-1024 rows


def _pe_kernel(params_ref, o_ref, *, seq_tile: int):
    """Standard layout: output block is (seq_tile, d_model)."""
    i = pl.program_id(0)
    params = params_ref[...]                                   # (2, d_model)
    rows = jax.lax.broadcasted_iota(jnp.int32, (seq_tile, 1), 0)
    pos = (i * seq_tile + rows).astype(jnp.float32)            # (seq_tile, 1)
    angle = pos * params[0:1, :] + params[1:2, :]              # (seq_tile, d_model)
    o_ref[...] = jnp.sin(angle)                                # cos via +pi/2 phase


def _pe_kernel_flat(params_ref, o_ref, *, row_tile: int, ppr: int):
    """Lane-dense layout: output block is (row_tile, 128); each 128-lane row
    holds `ppr = 128 // d_model` consecutive positions."""
    i = pl.program_id(0)
    params = params_ref[...]                                   # (3, 128)
    rows = jax.lax.broadcasted_iota(jnp.int32, (row_tile, 1), 0)
    base = ((i * row_tile + rows) * ppr).astype(jnp.float32)   # (row_tile, 1)
    pos = base + params[2:3, :]                                # (row_tile, 128)
    angle = pos * params[0:1, :] + params[1:2, :]
    o_ref[...] = jnp.sin(angle)


def positional_embedding(x: jax.Array, d_model: int) -> jax.Array:
    """Returns pe[:, :x.shape[1]] with shape (1, seq_len, d_model), float32.

    Note: the result depends only on (seq_len, d_model); in a real model this
    table should be computed once and cached (like the registered PyTorch
    buffer) so the kernel never sits on the steady-state critical path.
    """
    seq_len = int(x.shape[1])
    assert d_model % 2 == 0, "d_model must be even (sin/cos interleave)"

    # Per-column inverse frequency and phase (pi/2 on odd columns => cos).
    col = jnp.arange(d_model, dtype=jnp.int32)
    k = (col // 2).astype(jnp.float32)
    inv_freq = jnp.exp(k * (-2.0 * math.log(10000.0) / d_model))
    phase = (col % 2).astype(jnp.float32) * (math.pi / 2.0)

    cparams = pltpu.CompilerParams(dimension_semantics=("parallel",))

    if d_model < 128 and 128 % d_model == 0 and (seq_len * d_model) % 128 == 0:
        # Lane-dense flat layout: (total_rows, 128) so stores are unmasked.
        ppr = 128 // d_model                       # positions per 128-lane row
        total_rows = (seq_len * d_model) // 128
        params = jnp.stack([
            jnp.tile(inv_freq, ppr),
            jnp.tile(phase, ppr),
            (jnp.arange(128, dtype=jnp.int32) // d_model).astype(jnp.float32),
        ], axis=0)                                 # (3, 128)
        row_tile = _choose_row_tile(total_rows, 128 * 4)
        flat = pl.pallas_call(
            functools.partial(_pe_kernel_flat, row_tile=row_tile, ppr=ppr),
            out_shape=jax.ShapeDtypeStruct((total_rows, 128), jnp.float32),
            grid=(pl.cdiv(total_rows, row_tile),),
            in_specs=[pl.BlockSpec((3, 128), lambda i: (0, 0))],
            out_specs=pl.BlockSpec((row_tile, 128), lambda i: (i, 0)),
            compiler_params=cparams,
        )(params)
        return flat.reshape(1, seq_len, d_model)

    # Standard layout: (seq_tile, d_model) blocks, d_model on the lane axis.
    params = jnp.stack([inv_freq, phase], axis=0)  # (2, d_model)
    seq_tile = _choose_row_tile(seq_len, d_model * 4)
    pe = pl.pallas_call(
        functools.partial(_pe_kernel, seq_tile=seq_tile),
        out_shape=jax.ShapeDtypeStruct((seq_len, d_model), jnp.float32),
        grid=(pl.cdiv(seq_len, seq_tile),),
        in_specs=[pl.BlockSpec((2, d_model), lambda i: (0, 0))],
        out_specs=pl.BlockSpec((seq_tile, d_model), lambda i: (i, 0)),
        compiler_params=cparams,
    )(params)
    return pe.reshape(1, seq_len, d_model)


def _reference_pe(seq_len: int, d_model: int):
    """Pure-JAX reference mirroring the PyTorch buffer construction."""
    position = jnp.arange(seq_len, dtype=jnp.float32)[:, None]
    div_term = jnp.exp(
        jnp.arange(0, d_model, 2, dtype=jnp.float32)
        * (-(math.log(10000.0) / d_model)))
    pe = jnp.zeros((seq_len, d_model), dtype=jnp.float32)
    pe = pe.at[:, 0::2].set(jnp.sin(position * div_term))
    pe = pe.at[:, 1::2].set(jnp.cos(position * div_term))
    return pe[None]


if __name__ == "__main__":
    key = jax.random.PRNGKey(0)

    # Case 1 (matches the module's small test shapes): d_model < 128 triggers
    # the lane-dense flat-layout path. x's values are irrelevant to the
    # forward (only x.size(1) is used), but we build it deterministically.
    batch, seq_len, d_model = 2, 8, 32
    x = jax.random.normal(key, (batch, seq_len, d_model), dtype=jnp.float32)
    out = jax.block_until_ready(positional_embedding(x, d_model))
    ref = _reference_pe(seq_len, d_model)
    assert out.shape == (1, seq_len, d_model), out.shape
    assert out.dtype == jnp.float32
    assert jnp.allclose(out, ref, atol=1e-5, rtol=1e-5), "mismatch (flat path)"

    # Case 2: d_model >= 128 exercises the standard (seq_tile, d_model) path.
    seq_len2, d_model2 = 64, 128
    x2 = jax.random.normal(key, (batch, seq_len2, d_model2), dtype=jnp.float32)
    out2 = jax.block_until_ready(positional_embedding(x2, d_model2))
    ref2 = _reference_pe(seq_len2, d_model2)
    assert out2.shape == (1, seq_len2, d_model2), out2.shape
    assert jnp.allclose(out2, ref2, atol=1e-5, rtol=1e-5), "mismatch (standard path)"

    print("KERNEL_OK")
</pallas_src>

<mosaic_0001>
module attributes {stable_mosaic.version = 11 : i64} {
  func.func @_pe_kernel_flat(%arg0: i32, %arg1: memref<3x128xf32, #tpu.memory_space<vmem>>, %arg2: memref<2x128xf32, #tpu.memory_space<vmem>>) attributes {dimension_semantics = [#tpu.dimension_semantics<parallel>], iteration_bounds = array<i64: 1>, scalar_prefetch = 0 : i64, scratch_operands = 0 : i64, tpu.core_type = #tpu.core_type<tc>, window_params = [{pipeline_mode = #tpu.pipeline_mode<synchronous>, transform_indices = @transform_0, window_bounds = array<i64: 3, 128>}, {transform_indices = @transform_1, window_bounds = array<i64: 2, 128>}]} {
    %c0 = arith.constant 0 : index
    %c0_0 = arith.constant 0 : index
    %0 = vector.load %arg1[%c0, %c0_0] : memref<3x128xf32, #tpu.memory_space<vmem>>, vector<3x128xf32>
    %1 = tpu.iota {dimensions = array<i32: 0>} : vector<2x1xi32>
    %c2_i32 = arith.constant 2 : i32
    %2 = arith.muli %arg0, %c2_i32 : i32
    %3 = vector.broadcast %2 : i32 to vector<2x1xi32>
    %4 = arith.addi %3, %1 : vector<2x1xi32>
    %c4_i32 = arith.constant 4 : i32
    %5 = vector.broadcast %c4_i32 : i32 to vector<2x1xi32>
    %6 = arith.muli %4, %5 : vector<2x1xi32>
    %7 = arith.sitofp %6 : vector<2x1xi32> to vector<2x1xf32>
    %8 = vector.extract_strided_slice %0 {offsets = [2, 0], sizes = [1, 128], strides = [1, 1]} : vector<3x128xf32> to vector<1x128xf32>
    %9 = vector.broadcast %7 : vector<2x1xf32> to vector<2x128xf32>
    %10 = vector.broadcast %8 : vector<1x128xf32> to vector<2x128xf32>
    %11 = arith.addf %9, %10 : vector<2x128xf32>
    %12 = vector.extract_strided_slice %0 {offsets = [0, 0], sizes = [1, 128], strides = [1, 1]} : vector<3x128xf32> to vector<1x128xf32>
    %13 = vector.broadcast %12 : vector<1x128xf32> to vector<2x128xf32>
    %14 = arith.mulf %11, %13 : vector<2x128xf32>
    %15 = vector.extract_strided_slice %0 {offsets = [1, 0], sizes = [1, 128], strides = [1, 1]} : vector<3x128xf32> to vector<1x128xf32>
    %16 = vector.broadcast %15 : vector<1x128xf32> to vector<2x128xf32>
    %17 = arith.addf %14, %16 : vector<2x128xf32>
    %18 = math.sin %17 : vector<2x128xf32>
    %c0_1 = arith.constant 0 : index
    %c0_2 = arith.constant 0 : index
    %19 = vector.load %arg2[%c0_1, %c0_2] : memref<2x128xf32, #tpu.memory_space<vmem>>, vector<2x128xf32>
    tpu.vector_store %arg2[%c0_1, %c0_2], %18 {strides = array<i32>} : memref<2x128xf32, #tpu.memory_space<vmem>>, vector<2x128xf32>,
    return
  }
  func.func @transform_0(%arg0: i32) -> (i32, i32) {
    %c0_i32 = arith.constant 0 : i32
    %c0_i32_0 = arith.constant 0 : i32
    %c0_i32_1 = arith.constant 0 : i32
    return %c0_i32, %c0_i32_0 : i32, i32
  }
  func.func @transform_1(%arg0: i32) -> (i32, i32) {
    %c0_i32 = arith.constant 0 : i32
    %c0_i32_0 = arith.constant 0 : i32
    return %arg0, %c0_i32 : i32, i32
  }
}

</mosaic_0001>

<llo_original>
// kernel: tpu_custom_call.1
$region0: #{tpu_custom_call.1}
  #allocation0 [shape = 'u32[]', space=smem, size = 0x4, offset = 0x4, fixed_abs, tag = 'smem constant byte address 0x4 - core index']
  #allocation1 [shape = 'u32[144,128]{1,0:T(1,128)}', space=vmem, size = 0x12000, scoped, tag = 'internal scratch']
  %s0 = inlined_call_operand.hbm [shape: f32[3,128], index: 0, kind: input, shape index: {}]
  %s1 = inlined_call_operand.hbm [shape: f32[2,128], index: 1, kind: output, shape index: {}]
  %s2 = sld [smem:[#allocation0]]
  $region18: #{tpu_custom_call.1} parent=0
    _
  %s4 = ssub.s32 1, %s2
  %s5 = scalar_select 0, %s4, %s2
  $region1: #{tpu_custom_call.1} parent=0
    #allocation2 [shape = 'u8[2048]{0}', space=vmem, size = 0x800, scoped, tag = 'input window, operand 0, single buffered']
    #allocation3 [shape = 's32[1]{0}', space=sflag, size = 0x4, scoped, tag = 'scoped memory for tpu_custom_call.1']
    #allocation4 [shape = 's32[1]{0}', space=sflag, size = 0x4, scoped, tag = 'scoped memory for tpu_custom_call.1']
    #allocation5 [shape = 'u8[1024]{0}', space=vmem, size = 0x400, scoped, tag = 'output window, operand 0, single buffered']
    %6 = vsyncpa [#allocation3], 0
    %7 = vsyncpa [#allocation4], 0
    // Predicated region
    $region2: #{tpu_custom_call.1} parent=1 // pred_check
      _
    $region3: #{tpu_custom_call.1} parent=1 // pred_check_branch
      %9 = sbr.rel (0) target = $region5
    $region4: #{tpu_custom_call.1} parent=1 // pred_region
      %s11 = ssub.s32 64, 64
      %12 = vsyncadd [#allocation3], %s11
      %s14 = sshll.u32 [#allocation2], 4
      %s15 = int_to_ptr.vmem [resolvable:$true] %s14
      %17 = dma.hbm_to_vmem [thread:$0]  %s0, 64, %s15, [#allocation3]
    $region5: #{tpu_custom_call.1} parent=1 // pred_fallthru
      _
    // Predicated region
    $region6: #{tpu_custom_call.1} parent=1 // pred_check
      _
    $region7: #{tpu_custom_call.1} parent=1 // pred_check_branch
      %19 = sbr.rel (0) target = $region9
    $region8: #{tpu_custom_call.1} parent=1 // pred_region
      %20 = dma.done [#allocation3], 64
    $region9: #{tpu_custom_call.1} parent=1 // pred_fallthru
      _
    %v21 = vld [vmem:[#allocation2] sm:$0x7]
    %v22 = vlaneseq
    %v23 = vshrl.u32 %v22, 7
    %s24 = smul.u32 0, 2
    %v25 = vstv %s24
    %v26 = vadd.s32 %v25, %v23
    %v27 = vmul.u32 %v26, 4
    %v28 = vcvt.s32.f32 %v27
    %v29 = vlaneseq
    %v30 = vshrl.u32 %v29, 7
    %v31 = vsub.s32 2, %v30
    %v32 = vrot.slane %v21, %v31
    %v33 = vadd.f32 %v28, %v32
    %v34 = vlaneseq
    %v35 = vshrl.u32 %v34, 7
    %v36 = vsub.s32 0, %v35
    %v37 = vrot.slane %v21, %v36
    %v38 = vmul.f32 %v33, %v37
    %v39 = vlaneseq
    %v40 = vshrl.u32 %v39, 7
    %v41 = vsub.s32 1, %v40
    %v42 = vrot.slane %v21, %v41
    %v43 = vadd.f32 %v38, %v42
    %v44 = vand.u32 2147483647, %v43
    %vm45 = vcmp.le.f32.partialorder %v44, 0.7853982
    %vm46 = vcmp.lt.s32.totalorder %v43, 0
    %v47 = vand.u32 %v43, 2139095040
    %v48 = vshrl.u32 %v47, 23
    %v49 = vsub.s32 %v48, 127
    %v50 = vand.u32 2147483647, %v43
    %v51 = vand.u32 %v50, 8388607
    %v52 = vor.u32 %v51, 8388608
    %v53 = vsub.s32 0, %v52
    %v54 = vadd.s32 %v49, 1
    %vm55 = vcmp.gt.s32.totalorder %v54, 0
    %v56 = vsel %vm55, %v54, 0
    %v57 = vshrl.u32 %v56, 5
    %v58 = vand.u32 %v56, 31
    %v59 = vsub.s32 32, %v58
    %v60 = vshrl.u32 683565275, %v59
    %v61 = vshll.u32 683565275, %v58
    %v62 = vshrl.u32 2475754826, %v59
    %v63 = vor.u32 %v61, %v62
    %v64 = vshll.u32 2475754826, %v58
    %v65 = vshrl.u32 2131351028, %v59
    %v66 = vor.u32 %v64, %v65
    %v67 = vshll.u32 2131351028, %v58
    %v68 = vshrl.u32 2102212464, %v59
    %v69 = vor.u32 %v67, %v68
    %v70 = vshll.u32 2102212464, %v58
    %v71 = vshrl.u32 920167782, %v59
    %v72 = vor.u32 %v70, %v71
    %v73 = vshll.u32 920167782, %v58
    %v74 = vshrl.u32 1326507024, %v59
    %v75 = vor.u32 %v73, %v74
    %vm76 = vcmp.lt.s32.totalorder %v57, 1
    %vm77 = vcmp.lt.s32.totalorder %v57, 2
    %vm78 = vcmp.lt.s32.totalorder %v57, 3
    %vm79 = vcmp.lt.s32.totalorder %v57, 4
    %v80 = vsel %vm76, %v60, %v63
    %v81 = vsel %vm79, %v69, 2102212464
    %v82 = vsel %vm78, %v66, %v81
    %v83 = vsel %vm77, %v80, %v82
    %v84 = vsel %vm76, %v63, %v66
    %v85 = vsel %vm79, %v72, 920167782
    %v86 = vsel %vm78, %v69, %v85
    %v87 = vsel %vm77, %v84, %v86
    %v88 = vsel %vm76, %v66, %v69
    %v89 = vsel %vm79, %v75, 1326507024
    %v90 = vsel %vm78, %v72, %v89
    %v91 = vsel %vm77, %v88, %v90
    %v92 = vshll.u32 %v52, 8
    %v93 = vmul.u32.u64.compose %v92, %v91
    %v94 = vextract.low.u32 %v93
    %v95 = vextract.high.u32 %v93
    %v96 = vmul.u32.u64.compose %v92, %v87
    %v97 = vextract.low.u32 %v96
    %v98 = vextract.high.u32 %v96
    %v99 = vmul.u32 %v92, %v83
    %v100 = vadd.s32 %v95, %v97
    %vm101 = vc.u32 %v95, %v97
    %v102 = vadd.s32 %v98, 1
    %v103 = vsel %vm101, %v102, %v98
    %v104 = vadd.s32 %v99, %v103
    %v105 = vadd.s32 %v104, 536870912
    %v106 = vshrl.u32 %v105, 30
    %v107 = vshll.u32 %v106, 30
    %v108 = vsub.s32 %v104, %v107
    %vm109 = vcmp.lt.s32.totalorder %v108, 0
    %v110 = vsub.s32 0, %v108
    %v111 = vsel %vm109, %v110, %v108
    %v112 = vclz %v111
    %v113 = vsub.s32 %v112, 2
    %vm114 = vcmp.gt.s32.totalorder 0, %v113
    %v115 = vsel %vm114, 0, %v113
    %v116 = vsub.s32 32, %v115
    %v117 = vshll.u32 %v108, %v115
    %v118 = vshrl.u32 %v100, %v116
    %v119 = vor.u32 %v117, %v118
    %v120 = vsub.s32 4294967266, %v115
    %v121 = vadd.s32 %v120, 127
    %v122 = vshll.u32 %v121, 23
    %v123 = vor.u32 4788187, %v122
    %v124 = vand.u32 2147483647, %v123
    %v126 = vcvt.s32.f32 %v119
    %v127 = vmul.f32 %v126, %v124
    %v128 = vxor.u32 %v127, 2147483648
    %v129 = vsel %vm46, %v128, %v127
    %v130 = vsub.s32 4, %v106
    %v131 = vsel %vm46, %v130, %v106
    %v132 = vsel %vm45, %v43, %v129
    %v133 = vsel %vm45, 0, %v131
    %v134 = vcosq.f32.pop %v132
    %v135 = vsinq.f32.pop %v132
    %vm136 = vweird.f32 %v43
    %v137 = vadd.s32 %v133, 3
    %v138 = vand.u32 %v137, 3
    %vm139 = vcmp.lt.s32.totalorder %v138, 2
    %vm140 = vcmp.eq.s32.totalorder %v138, 0
    %v141 = vxor.u32 %v135, 2147483648
    %v142 = vsel %vm140, %v134, %v141
    %vm143 = vcmp.eq.s32.totalorder %v138, 2
    %v144 = vxor.u32 %v134, 2147483648
    %v145 = vsel %vm143, %v144, %v135
    %v146 = vsel %vm139, %v142, %v145
    %v147 = vsel %vm136, nan, %v146
    %148 = vst [vmem:[#allocation5] sm:$0x3] %v147
    // Predicated region
    $region10: #{tpu_custom_call.1} parent=1 // pred_check
      _
    $region11: #{tpu_custom_call.1} parent=1 // pred_check_branch
      %150 = sbr.rel (0) target = $region13
    $region12: #{tpu_custom_call.1} parent=1 // pred_region
      %s152 = ssub.s32 32, 32
      %153 = vsyncadd [#allocation4], %s152
      %s155 = sshll.u32 [#allocation5], 4
      %s156 = int_to_ptr.vmem [resolvable:$true] %s155
      %158 = dma.vmem_to_hbm [thread:$0]  %s156, 32, %s1, [#allocation4]
    $region13: #{tpu_custom_call.1} parent=1 // pred_fallthru
      _
    // Predicated region
    $region14: #{tpu_custom_call.1} parent=1 // pred_check
      _
    $region15: #{tpu_custom_call.1} parent=1 // pred_check_branch
      %160 = sbr.rel (0) target = $region17
    $region16: #{tpu_custom_call.1} parent=1 // pred_region
      %161 = dma.done [#allocation4], 32
    $region17: #{tpu_custom_call.1} parent=1 // pred_fallthru
      _
    %162 = vsyncpa [#allocation3], 1
    %163 = vsyncpa [#allocation4], 1

</llo_original>
